<compile_context>
chip_gen: v7x
topology: tpu7x:2x2x1
jax: 0.10.0
libtpu: 0.0.40
codegen_flags: <defaults>
</compile_context>

<pallas_src>
import functools

import jax
import jax.numpy as jnp
from jax.experimental import pallas as pl
from jax.experimental.pallas import tpu as pltpu

LN_EPS = 1e-5


# ---------------------------------------------------------------------------
# Pre-pass: project K and V once  (kp = k @ WkT + bk, vp = v @ WvT + bv).
# ---------------------------------------------------------------------------
def kv_project_kernel(k_ref, v_ref, wk_ref, bk_ref, wv_ref, bv_ref,
                      kp_ref, vp_ref, *, compute_dtype):
    kp = (
        jnp.dot(k_ref[...].astype(compute_dtype), wk_ref[...].astype(compute_dtype),
                preferred_element_type=jnp.float32)
        + bk_ref[...]
    )
    vp = (
        jnp.dot(v_ref[...].astype(compute_dtype), wv_ref[...].astype(compute_dtype),
                preferred_element_type=jnp.float32)
        + bv_ref[...]
    )
    kp_ref[...] = kp.astype(kp_ref.dtype)
    vp_ref[...] = vp.astype(vp_ref.dtype)


# ---------------------------------------------------------------------------
# Main pass: q projection + flash-style cross attention + residual/LN + MLP
#            + residual/LN, all fused, streaming projected K/V tiles.
# ---------------------------------------------------------------------------
def transformer_cross_kernel(
    # inputs
    q_ref, kp_ref, vp_ref,
    wq_ref, bq_ref,
    w1_ref, b1_ref, w2_ref, b2_ref,
    g_ref, be_ref,
    # outputs
    o_ref,
    # scratch (persists across the Sk grid axis)
    qproj_ref, m_ref, l_ref, acc_ref,
    *, compute_dtype,
):
    j = pl.program_id(1)
    nj = pl.num_programs(1)

    # ---- per-query-tile init: project q once, reset online-softmax state ----
    @pl.when(j == 0)
    def _():
        qproj_ref[...] = (
            jnp.dot(q_ref[...].astype(compute_dtype),
                    wq_ref[...].astype(compute_dtype),
                    preferred_element_type=jnp.float32)
            + bq_ref[...]
        )
        m_ref[...] = jnp.full(m_ref.shape, -jnp.inf, dtype=m_ref.dtype)
        l_ref[...] = jnp.zeros(l_ref.shape, dtype=l_ref.dtype)
        acc_ref[...] = jnp.zeros(acc_ref.shape, dtype=acc_ref.dtype)

    # ---- scores = q_t @ k_t^T (contract last axes; no explicit transpose) ----
    k_t = kp_ref[...].astype(compute_dtype)
    v_t = vp_ref[...].astype(compute_dtype)
    s = jax.lax.dot_general(
        qproj_ref[...].astype(compute_dtype), k_t,
        dimension_numbers=(((1,), (1,)), ((), ())),
        preferred_element_type=jnp.float32,
    )

    # ---- online softmax update ----
    m_prev = m_ref[...]
    m_new = jnp.maximum(m_prev, jnp.max(s, axis=-1, keepdims=True))
    alpha = jnp.exp(m_prev - m_new)
    p = jnp.exp(s - m_new)
    l_ref[...] = alpha * l_ref[...] + jnp.sum(p, axis=-1, keepdims=True)
    acc_ref[...] = alpha * acc_ref[...] + jnp.dot(
        p.astype(compute_dtype), v_t, preferred_element_type=jnp.float32)
    m_ref[...] = m_new

    # ---- finalize: softmax normalize, residual+LN, MLP, residual+LN ----
    @pl.when(j == nj - 1)
    def _():
        tq, h = o_ref.shape
        gamma = pl.broadcast_to(g_ref[...], (tq, h))   # hoisted: used by both LNs
        beta = pl.broadcast_to(be_ref[...], (tq, h))

        def layer_norm(x):
            mu = jnp.mean(x, axis=-1, keepdims=True)
            var = jnp.mean((x - mu) ** 2, axis=-1, keepdims=True)
            return (x - mu) * jax.lax.rsqrt(var + LN_EPS) * gamma + beta

        attn_out = acc_ref[...] * pl.reciprocal(l_ref[...], approx=False)
        attention_output = layer_norm(attn_out + q_ref[...])

        hmid = (
            jnp.dot(attention_output.astype(compute_dtype),
                    w1_ref[...].astype(compute_dtype),
                    preferred_element_type=jnp.float32)
            + b1_ref[...]
        )
        hmid = jnp.maximum(hmid, 0.0)
        mlp_out = (
            jnp.dot(hmid.astype(compute_dtype), w2_ref[...].astype(compute_dtype),
                    preferred_element_type=jnp.float32)
            + b2_ref[...]
        )

        o_ref[...] = layer_norm(mlp_out + attention_output).astype(o_ref.dtype)


# ---------------------------------------------------------------------------
# BlockSpec helpers (no late-binding lambda capture of loop variables).
# ---------------------------------------------------------------------------
def _q_spec(shape):
    return pl.BlockSpec(shape, lambda i, j: (i, 0))


def _kv_spec(shape):
    return pl.BlockSpec(shape, lambda i, j: (j, 0))


def _const_spec(shape):
    return pl.BlockSpec(shape, lambda i, j: (0, 0))


def _row_spec1(shape):
    return pl.BlockSpec(shape, lambda i: (i, 0))


def _const_spec1(shape):
    return pl.BlockSpec(shape, lambda i: (0, 0))


def _pick_tile(dim, target):
    """Largest tile <= target that evenly divides dim, else the full dim."""
    if dim <= target:
        return dim
    if dim % target == 0:
        return target
    return dim


def transformer_cross(query, key, value, params, *,
                      matmul_dtype=jnp.float32, tq=256, tk=256):
    """params: dict of torch-layout weights; see init_params()."""
    Sq, H = query.shape
    Sk, _ = key.shape
    MLP = params["w1"].shape[0]  # 128

    TQ = _pick_tile(Sq, tq)
    TK = _pick_tile(Sk, tk)
    TKP = _pick_tile(Sk, 512)          # pre-pass row tile
    n_q, n_k = Sq // TQ, Sk // TK

    wd = matmul_dtype

    # ---------------- pre-pass: project K and V once ----------------
    kv_flops = int(2 * Sk * H * H * 2)
    kv_bytes = int(4 * (4 * Sk * H + 2 * H * H + 2 * H))
    kproj, vproj = pl.pallas_call(
        functools.partial(kv_project_kernel, compute_dtype=wd),
        out_shape=(jax.ShapeDtypeStruct((Sk, H), wd),
                   jax.ShapeDtypeStruct((Sk, H), wd)),
        grid=(Sk // TKP,),
        in_specs=[
            _row_spec1((TKP, H)), _row_spec1((TKP, H)),
            _const_spec1((H, H)), _const_spec1((1, H)),
            _const_spec1((H, H)), _const_spec1((1, H)),
        ],
        out_specs=(_row_spec1((TKP, H)), _row_spec1((TKP, H))),
        compiler_params=pltpu.CompilerParams(
            dimension_semantics=("parallel",),
            vmem_limit_bytes=32 << 20,
        ),
        cost_estimate=pl.CostEstimate(
            flops=kv_flops, transcendentals=0, bytes_accessed=kv_bytes),
    )(
        key, value,
        params["wk"].T.astype(wd), params["bk"].reshape(1, H),
        params["wv"].T.astype(wd), params["bv"].reshape(1, H),
    )

    # ---------------- main pass: fused attention + MLP + LN ----------------
    args = (
        query, kproj, vproj,
        params["wq"].T.astype(wd), params["bq"].reshape(1, H),
        params["w1"].T.astype(wd), params["b1"].reshape(1, MLP),
        params["w2"].T.astype(wd), params["b2"].reshape(1, H),
        params["ln_g"].reshape(1, H), params["ln_b"].reshape(1, H),
    )

    in_specs = [
        _q_spec((TQ, H)),                               # query
        _kv_spec((TK, H)),                              # projected key
        _kv_spec((TK, H)),                              # projected value
        _const_spec((H, H)), _const_spec((1, H)),       # wq, bq
        _const_spec((H, MLP)), _const_spec((1, MLP)),   # w1, b1
        _const_spec((MLP, H)), _const_spec((1, H)),     # w2, b2
        _const_spec((1, H)), _const_spec((1, H)),       # ln gamma, beta
    ]
    out_spec = _q_spec((TQ, H))

    flops = int(
        2 * Sq * H * H              # q projection
        + 2 * Sq * Sk * H * 2       # q k^T and p v
        + 2 * Sq * H * MLP * 2      # MLP
    )
    transcendentals = int(Sq * Sk + Sq * n_k + 4 * Sq)
    bytes_accessed = int(4 * (2 * Sq * H + 2 * n_q * Sk * H
                              + H * H + 2 * H * MLP + 6 * H + MLP))

    kernel = functools.partial(transformer_cross_kernel, compute_dtype=wd)

    return pl.pallas_call(
        kernel,
        out_shape=jax.ShapeDtypeStruct((Sq, H), jnp.float32),
        grid=(n_q, n_k),
        in_specs=in_specs,
        out_specs=out_spec,
        scratch_shapes=[
            pltpu.VMEM((TQ, H), jnp.float32),   # projected q
            pltpu.VMEM((TQ, 1), jnp.float32),   # running max
            pltpu.VMEM((TQ, 1), jnp.float32),   # running sum
            pltpu.VMEM((TQ, H), jnp.float32),   # output accumulator
        ],
        compiler_params=pltpu.CompilerParams(
            dimension_semantics=("parallel", "arbitrary"),
            vmem_limit_bytes=32 << 20,
        ),
        cost_estimate=pl.CostEstimate(
            flops=flops,
            transcendentals=transcendentals,
            bytes_accessed=bytes_accessed,
        ),
    )(*args)


def init_params(key, hidden_dim, mlp_dim=128):
    ks = jax.random.split(key, 10)

    def lin(kw, kb, fan_in, fan_out):
        bound = 1.0 / jnp.sqrt(fan_in)
        w = jax.random.uniform(kw, (fan_out, fan_in), jnp.float32, -bound, bound)
        b = jax.random.uniform(kb, (fan_out,), jnp.float32, -bound, bound)
        return w, b

    wq, bq = lin(ks[0], ks[1], hidden_dim, hidden_dim)
    wk, bk = lin(ks[2], ks[3], hidden_dim, hidden_dim)
    wv, bv = lin(ks[4], ks[5], hidden_dim, hidden_dim)
    w1, b1 = lin(ks[6], ks[7], hidden_dim, mlp_dim)
    w2, b2 = lin(ks[8], ks[9], mlp_dim, hidden_dim)
    return dict(
        wq=wq, bq=bq, wk=wk, bk=bk, wv=wv, bv=bv,
        w1=w1, b1=b1, w2=w2, b2=b2,
        ln_g=jnp.ones((hidden_dim,), jnp.float32),
        ln_b=jnp.zeros((hidden_dim,), jnp.float32),
    )


def reference(query, key, value, p):
    """Pure-JAX reference mirroring the PyTorch forward."""
    qt = query @ p["wq"].T + p["bq"]
    kt = key @ p["wk"].T + p["bk"]
    vt = value @ p["wv"].T + p["bv"]
    attn = jax.nn.softmax(qt @ kt.T, axis=-1)
    out = attn @ vt

    def ln(x):
        mu = x.mean(-1, keepdims=True)
        var = ((x - mu) ** 2).mean(-1, keepdims=True)
        return (x - mu) / jnp.sqrt(var + LN_EPS) * p["ln_g"] + p["ln_b"]

    a = ln(out + query)
    h = jnp.maximum(a @ p["w1"].T + p["b1"], 0.0)
    mlp = h @ p["w2"].T + p["b2"]
    return ln(mlp + a)


if __name__ == "__main__":
    key0 = jax.random.PRNGKey(0)
    k_q, k_k, k_v, k_p = jax.random.split(key0, 4)

    # --- primary small-shape check (shapes implied by the module) ---
    HIDDEN = 32
    SQ, SK = 8, 8
    query = jax.random.normal(k_q, (SQ, HIDDEN), jnp.float32)
    key = jax.random.normal(k_k, (SK, HIDDEN), jnp.float32)
    value = jax.random.normal(k_v, (SK, HIDDEN), jnp.float32)
    params = init_params(k_p, HIDDEN)

    out = jax.block_until_ready(transformer_cross(query, key, value, params))
    ref = reference(query, key, value, params)
    assert out.shape == (SQ, HIDDEN)
    assert jnp.allclose(out, ref, atol=1e-4, rtol=1e-4), (
        f"max abs err {jnp.max(jnp.abs(out - ref))}"
    )

    # --- multi-tile check: exercises the (parallel, arbitrary) grid, the
    #     online-softmax streaming path and the K/V pre-pass (grid = (2, 2)) ---
    HIDDEN2, SQ2, SK2 = 128, 512, 512
    k_q2, k_k2, k_v2, k_p2 = jax.random.split(jax.random.PRNGKey(1), 4)
    q2 = jax.random.normal(k_q2, (SQ2, HIDDEN2), jnp.float32)
    k2 = jax.random.normal(k_k2, (SK2, HIDDEN2), jnp.float32)
    v2 = jax.random.normal(k_v2, (SK2, HIDDEN2), jnp.float32)
    p2 = init_params(k_p2, HIDDEN2)

    out2 = jax.block_until_ready(transformer_cross(q2, k2, v2, p2))
    ref2 = reference(q2, k2, v2, p2)
    assert jnp.allclose(out2, ref2, atol=1e-3, rtol=1e-3), (
        f"max abs err {jnp.max(jnp.abs(out2 - ref2))}"
    )

    # TODO(synk): for H not a multiple of 128 (e.g. the H=32 demo) the output is
    # lane-sparse; pad H / batch rows in the caller for production shapes.
    print("KERNEL_OK")
</pallas_src>

<mosaic_0001>
module attributes {stable_mosaic.version = 11 : i64} {
  func.func @kv_project_kernel(%arg0: i32, %arg1: memref<8x32xf32, #tpu.memory_space<vmem>>, %arg2: memref<8x32xf32, #tpu.memory_space<vmem>>, %arg3: memref<32x32xf32, #tpu.memory_space<vmem>>, %arg4: memref<1x32xf32, #tpu.memory_space<vmem>>, %arg5: memref<32x32xf32, #tpu.memory_space<vmem>>, %arg6: memref<1x32xf32, #tpu.memory_space<vmem>>, %arg7: memref<8x32xf32, #tpu.memory_space<vmem>>, %arg8: memref<8x32xf32, #tpu.memory_space<vmem>>) attributes {dimension_semantics = [#tpu.dimension_semantics<parallel>], iteration_bounds = array<i64: 1>, scalar_prefetch = 0 : i64, scratch_operands = 0 : i64, tpu.core_type = #tpu.core_type<tc>, window_params = [{transform_indices = @transform_0, window_bounds = array<i64: 8, 32>}, {transform_indices = @transform_1, window_bounds = array<i64: 8, 32>}, {pipeline_mode = #tpu.pipeline_mode<synchronous>, transform_indices = @transform_2, window_bounds = array<i64: 32, 32>}, {pipeline_mode = #tpu.pipeline_mode<synchronous>, transform_indices = @transform_3, window_bounds = array<i64: 1, 32>}, {pipeline_mode = #tpu.pipeline_mode<synchronous>, transform_indices = @transform_4, window_bounds = array<i64: 32, 32>}, {pipeline_mode = #tpu.pipeline_mode<synchronous>, transform_indices = @transform_5, window_bounds = array<i64: 1, 32>}, {transform_indices = @transform_6, window_bounds = array<i64: 8, 32>}, {transform_indices = @transform_7, window_bounds = array<i64: 8, 32>}]} {
    %c0 = arith.constant 0 : index
    %c0_0 = arith.constant 0 : index
    %0 = vector.load %arg1[%c0, %c0_0] : memref<8x32xf32, #tpu.memory_space<vmem>>, vector<8x32xf32>
    %c0_1 = arith.constant 0 : index
    %c0_2 = arith.constant 0 : index
    %1 = vector.load %arg3[%c0_1, %c0_2] : memref<32x32xf32, #tpu.memory_space<vmem>>, vector<32x32xf32>
    %cst = arith.constant dense<0.000000e+00> : vector<8x32xf32>
    %2 = tpu.matmul %0, %1, %cst {dimension_numbers = #tpu.dot_dimension_numbers<[1], [0], [0], [1], [0, 0, 1, 1], [], []>} : vector<8x32xf32>, vector<32x32xf32>, vector<8x32xf32> -> vector<8x32xf32>
    %c0_3 = arith.constant 0 : index
    %c0_4 = arith.constant 0 : index
    %3 = vector.load %arg4[%c0_3, %c0_4] : memref<1x32xf32, #tpu.memory_space<vmem>>, vector<1x32xf32>
    %4 = vector.broadcast %3 : vector<1x32xf32> to vector<8x32xf32>
    %5 = arith.addf %2, %4 : vector<8x32xf32>
    %c0_5 = arith.constant 0 : index
    %c0_6 = arith.constant 0 : index
    %6 = vector.load %arg2[%c0_5, %c0_6] : memref<8x32xf32, #tpu.memory_space<vmem>>, vector<8x32xf32>
    %c0_7 = arith.constant 0 : index
    %c0_8 = arith.constant 0 : index
    %7 = vector.load %arg5[%c0_7, %c0_8] : memref<32x32xf32, #tpu.memory_space<vmem>>, vector<32x32xf32>
    %cst_9 = arith.constant dense<0.000000e+00> : vector<8x32xf32>
    %8 = tpu.matmul %6, %7, %cst_9 {dimension_numbers = #tpu.dot_dimension_numbers<[1], [0], [0], [1], [0, 0, 1, 1], [], []>} : vector<8x32xf32>, vector<32x32xf32>, vector<8x32xf32> -> vector<8x32xf32>
    %c0_10 = arith.constant 0 : index
    %c0_11 = arith.constant 0 : index
    %9 = vector.load %arg6[%c0_10, %c0_11] : memref<1x32xf32, #tpu.memory_space<vmem>>, vector<1x32xf32>
    %10 = vector.broadcast %9 : vector<1x32xf32> to vector<8x32xf32>
    %11 = arith.addf %8, %10 : vector<8x32xf32>
    %c0_12 = arith.constant 0 : index
    %c0_13 = arith.constant 0 : index
    %12 = vector.load %arg7[%c0_12, %c0_13] : memref<8x32xf32, #tpu.memory_space<vmem>>, vector<8x32xf32>
    tpu.vector_store %arg7[%c0_12, %c0_13], %5 {strides = array<i32>} : memref<8x32xf32, #tpu.memory_space<vmem>>, vector<8x32xf32>,
    %c0_14 = arith.constant 0 : index
    %c0_15 = arith.constant 0 : index
    %13 = vector.load %arg8[%c0_14, %c0_15] : memref<8x32xf32, #tpu.memory_space<vmem>>, vector<8x32xf32>
    tpu.vector_store %arg8[%c0_14, %c0_15], %11 {strides = array<i32>} : memref<8x32xf32, #tpu.memory_space<vmem>>, vector<8x32xf32>,
    return
  }
  func.func @transform_0(%arg0: i32) -> (i32, i32) {
    %c0_i32 = arith.constant 0 : i32
    %c0_i32_0 = arith.constant 0 : i32
    return %arg0, %c0_i32 : i32, i32
  }
  func.func @transform_1(%arg0: i32) -> (i32, i32) {
    %c0_i32 = arith.constant 0 : i32
    %c0_i32_0 = arith.constant 0 : i32
    return %arg0, %c0_i32 : i32, i32
  }
  func.func @transform_2(%arg0: i32) -> (i32, i32) {
    %c0_i32 = arith.constant 0 : i32
    %c0_i32_0 = arith.constant 0 : i32
    %c0_i32_1 = arith.constant 0 : i32
    return %c0_i32, %c0_i32_0 : i32, i32
  }
  func.func @transform_3(%arg0: i32) -> (i32, i32) {
    %c0_i32 = arith.constant 0 : i32
    %c0_i32_0 = arith.constant 0 : i32
    %c0_i32_1 = arith.constant 0 : i32
    return %c0_i32, %c0_i32_0 : i32, i32
  }
  func.func @transform_4(%arg0: i32) -> (i32, i32) {
    %c0_i32 = arith.constant 0 : i32
    %c0_i32_0 = arith.constant 0 : i32
    %c0_i32_1 = arith.constant 0 : i32
    return %c0_i32, %c0_i32_0 : i32, i32
  }
  func.func @transform_5(%arg0: i32) -> (i32, i32) {
    %c0_i32 = arith.constant 0 : i32
    %c0_i32_0 = arith.constant 0 : i32
    %c0_i32_1 = arith.constant 0 : i32
    return %c0_i32, %c0_i32_0 : i32, i32
  }
  func.func @transform_6(%arg0: i32) -> (i32, i32) {
    %c0_i32 = arith.constant 0 : i32
    %c0_i32_0 = arith.constant 0 : i32
    return %arg0, %c0_i32 : i32, i32
  }
  func.func @transform_7(%arg0: i32) -> (i32, i32) {
    %c0_i32 = arith.constant 0 : i32
    %c0_i32_0 = arith.constant 0 : i32
    return %arg0, %c0_i32 : i32, i32
  }
}

</mosaic_0001>

<llo_original>
// kernel: tpu_custom_call.1
$region0: #{tpu_custom_call.1}
  #allocation0 [shape = 'u32[]', space=smem, size = 0x4, offset = 0x4, fixed_abs, tag = 'smem constant byte address 0x4 - core index']
  #allocation1 [shape = 'u32[144,128]{1,0:T(1,128)}', space=vmem, size = 0x12000, scoped, tag = 'internal scratch']
  %s0 = inlined_call_operand.hbm [shape: f32[8,32], index: 0, kind: input, shape index: {}]
  %s1 = inlined_call_operand.hbm [shape: f32[8,32], index: 1, kind: input, shape index: {}]
  %s2 = inlined_call_operand.hbm [shape: f32[32,32], index: 2, kind: input, shape index: {}]
  %s3 = inlined_call_operand.vmem [shape: f32[1,32], index: 3, kind: input, shape index: {}]
  %s4 = inlined_call_operand.hbm [shape: f32[32,32], index: 4, kind: input, shape index: {}]
  %s5 = inlined_call_operand.vmem [shape: f32[1,32], index: 5, kind: input, shape index: {}]
  %s6 = inlined_call_operand.hbm [shape: f32[8,32], index: 6, kind: output, shape index: {0}]
  %s7 = inlined_call_operand.hbm [shape: f32[8,32], index: 7, kind: output, shape index: {1}]
  %8 = xla_tuple %s6, %s7
  %s9 = sld [smem:[#allocation0]]
  $region58: #{tpu_custom_call.1} parent=0
    _
  %s11 = ssub.s32 1, %s9
  %s12 = scalar_select 0, %s11, %s9
  $region1: #{tpu_custom_call.1} parent=0
    #allocation2 [shape = 'u8[4096]{0}', space=vmem, size = 0x1000, scoped, tag = 'input window, operand 0, single buffered']
    #allocation3 [shape = 's32[1]{0}', space=sflag, size = 0x4, scoped, tag = 'scoped memory for tpu_custom_call.1']
    #allocation4 [shape = 's32[1]{0}', space=sflag, size = 0x4, scoped, tag = 'scoped memory for tpu_custom_call.1']
    #allocation5 [shape = 'u8[4096]{0}', space=vmem, size = 0x1000, scoped, tag = 'input window, operand 1, single buffered']
    #allocation6 [shape = 's32[1]{0}', space=sflag, size = 0x4, scoped, tag = 'scoped memory for tpu_custom_call.1']
    #allocation7 [shape = 'u8[16384]{0}', space=vmem, size = 0x4000, scoped, tag = 'input window, operand 2, single buffered']
    #allocation8 [shape = 'u8[16384]{0}', space=vmem, size = 0x4000, scoped, tag = 'input window, operand 4, single buffered']
    #allocation9 [shape = 's32[1]{0}', space=sflag, size = 0x4, scoped, tag = 'scoped memory for tpu_custom_call.1']
    #allocation10 [shape = 'u8[4096]{0}', space=vmem, size = 0x1000, scoped, tag = 'output window, operand 0, single buffered']
    #allocation11 [shape = 'u8[4096]{0}', space=vmem, size = 0x1000, scoped, tag = 'output window, operand 1, single buffered']
    #allocation12 [shape = 's32[1]{0}', space=sflag, size = 0x4, scoped, tag = 'scoped memory for tpu_custom_call.1']
    %13 = vsyncpa [#allocation3], 0
    %14 = vsyncpa [#allocation6], 0
    %15 = vsyncpa [#allocation9], 0
    %16 = vsyncpa [#allocation4], 0
    %17 = vsyncpa [#allocation12], 0
    // Predicated region
    $region2: #{tpu_custom_call.1} parent=1 // pred_check
      _
    $region3: #{tpu_custom_call.1} parent=1 // pred_check_branch
      %19 = sbr.rel (0) target = $region5
    $region4: #{tpu_custom_call.1} parent=1 // pred_region
      %s21 = ssub.s32 128, 128
      %22 = vsyncadd [#allocation3], %s21
      %s24 = sshll.u32 [#allocation2], 4
      %s25 = int_to_ptr.vmem [resolvable:$true] %s24
      %27 = dma.hbm_to_vmem [thread:$0]  %s0, 128, %s25, [#allocation3]
    $region5: #{tpu_custom_call.1} parent=1 // pred_fallthru
      _
    // Predicated region
    $region6: #{tpu_custom_call.1} parent=1 // pred_check
      _
    $region7: #{tpu_custom_call.1} parent=1 // pred_check_branch
      %29 = sbr.rel (0) target = $region9
    $region8: #{tpu_custom_call.1} parent=1 // pred_region
      %s31 = ssub.s32 128, 128
      %32 = vsyncadd [#allocation6], %s31
      %s34 = sshll.u32 [#allocation5], 4
      %s35 = int_to_ptr.vmem [resolvable:$true] %s34
      %37 = dma.hbm_to_vmem [thread:$0]  %s1, 128, %s35, [#allocation6]
    $region9: #{tpu_custom_call.1} parent=1 // pred_fallthru
      _
    // Predicated region
    $region10: #{tpu_custom_call.1} parent=1 // pred_check
      _
    $region11: #{tpu_custom_call.1} parent=1 // pred_check_branch
      %39 = sbr.rel (0) target = $region13
    $region12: #{tpu_custom_call.1} parent=1 // pred_region
      %s41 = ssub.s32 512, 512
      %42 = vsyncadd [#allocation6], %s41
      %s43 = sshll.u32 [#allocation7], 4
      %s44 = int_to_ptr.vmem [resolvable:$true] %s43
      %49 = dma.hbm_to_vmem [thread:$0]  %s2, 512, %s44, [#allocation6], 128, 128, 8
    $region13: #{tpu_custom_call.1} parent=1 // pred_fallthru
      _
    // Predicated region
    $region14: #{tpu_custom_call.1} parent=1 // pred_check
      _
    $region15: #{tpu_custom_call.1} parent=1 // pred_check_branch
      %51 = sbr.rel (0) target = $region17
    $region16: #{tpu_custom_call.1} parent=1 // pred_region
      _
    $region17: #{tpu_custom_call.1} parent=1 // pred_fallthru
      _
    // Predicated region
    $region18: #{tpu_custom_call.1} parent=1 // pred_check
      _
    $region19: #{tpu_custom_call.1} parent=1 // pred_check_branch
      %53 = sbr.rel (0) target = $region21
    $region20: #{tpu_custom_call.1} parent=1 // pred_region
      %s55 = ssub.s32 512, 512
      %56 = vsyncadd [#allocation9], %s55
      %s57 = sshll.u32 [#allocation8], 4
      %s58 = int_to_ptr.vmem [resolvable:$true] %s57
      %63 = dma.hbm_to_vmem [thread:$0]  %s4, 512, %s58, [#allocation9], 128, 128, 8
    $region21: #{tpu_custom_call.1} parent=1 // pred_fallthru
      _
    // Predicated region
    $region22: #{tpu_custom_call.1} parent=1 // pred_check
      _
    $region23: #{tpu_custom_call.1} parent=1 // pred_check_branch
      %65 = sbr.rel (0) target = $region25
    $region24: #{tpu_custom_call.1} parent=1 // pred_region
      _
    $region25: #{tpu_custom_call.1} parent=1 // pred_fallthru
      _
    // Predicated region
    $region26: #{tpu_custom_call.1} parent=1 // pred_check
      _
    $region27: #{tpu_custom_call.1} parent=1 // pred_check_branch
      %67 = sbr.rel (0) target = $region29
    $region28: #{tpu_custom_call.1} parent=1 // pred_region
      %68 = dma.done [#allocation3], 128
    $region29: #{tpu_custom_call.1} parent=1 // pred_fallthru
      _
    // Predicated region
    $region30: #{tpu_custom_call.1} parent=1 // pred_check
      _
    $region31: #{tpu_custom_call.1} parent=1 // pred_check_branch
      %70 = sbr.rel (0) target = $region33
    $region32: #{tpu_custom_call.1} parent=1 // pred_region
      %71 = dma.done [#allocation6], 128
    $region33: #{tpu_custom_call.1} parent=1 // pred_fallthru
      _
    // Predicated region
    $region34: #{tpu_custom_call.1} parent=1 // pred_check
      _
    $region35: #{tpu_custom_call.1} parent=1 // pred_check_branch
      %73 = sbr.rel (0) target = $region37
    $region36: #{tpu_custom_call.1} parent=1 // pred_region
      %74 = dma.done [#allocation6], 512
    $region37: #{tpu_custom_call.1} parent=1 // pred_fallthru
      _
    // Predicated region
    $region38: #{tpu_custom_call.1} parent=1 // pred_check
      _
    $region39: #{tpu_custom_call.1} parent=1 // pred_check_branch
      %76 = sbr.rel (0) target = $region41
    $region40: #{tpu_custom_call.1} parent=1 // pred_region
      %77 = dma.done [#allocation9], 512
    $region41: #{tpu_custom_call.1} parent=1 // pred_fallthru
      _
    %v78 = vld [vmem:[#allocation2] sm:$0xff]
    %v79 = vld [vmem:[#allocation7] sm:$0xff]
    %v80 = vld [vmem:[#allocation7 + $0x8] sm:$0xff]
    %v81 = vld [vmem:[#allocation7 + $0x10] sm:$0xff]
    %v82 = vld [vmem:[#allocation7 + $0x18] sm:$0xff]
    %v83 = vld [vmem:[%s3] sm:$0x1]
    %v85 = vlaneseq
    %v86 = vshrl.u32 %v85, 7
    %v87 = vsub.s32 0, %v86
    %v88 = vrot.slane %v83, %v87
    %vm90 = vcmask 261120
    %v92 = vsel %vm90, %v78, 0
    %94 = vmatprep.subr.mxu0 0.0
    %95 = vmatpush1.msra.mxu0 %v79
    %96 = vmatprep.subr.mxu0 0.0
    %97 = vmatpush1.msra.mxu0 %v80
    %98 = vmatprep.subr.mxu0 0.0
    %99 = vmatpush1.msra.mxu0 %v81
    %100 = vmatprep.subr.mxu0 0.0
    %101 = vmatpush1.msra.mxu0 %v82
    %102 = vmatprep.subr.mxu0 0.0
    %103 = vmatpush1.msra.mxu0 0.0
    %104 = vmatprep.subr.mxu0 0.0
    %105 = vmatpush1.msra.mxu0 0.0
    %106 = vmatprep.subr.mxu0 0.0
    %107 = vmatpush1.msra.mxu0 0.0
    %108 = vmatprep.subr.mxu0 0.0
    %109 = vmatpush1.msra.mxu0 0.0
    %110 = vmatprep.subr.mxu0 0.0
    %111 = vmatpush1.msra.mxu0 0.0
    %112 = vmatprep.subr.mxu0 0.0
    %113 = vmatpush1.msra.mxu0 0.0
    %114 = vmatprep.subr.mxu0 0.0
    %115 = vmatpush1.msra.mxu0 0.0
    %116 = vmatprep.subr.mxu0 0.0
    %117 = vmatpush1.msra.mxu0 0.0
    %118 = vmatprep.subr.mxu0 0.0
    %119 = vmatpush1.msra.mxu0 0.0
    %120 = vmatprep.subr.mxu0 0.0
    %121 = vmatpush1.msra.mxu0 0.0
    %122 = vmatprep.subr.mxu0 0.0
    %123 = vmatpush1.msra.mxu0 0.0
    %124 = vmatprep.subr.mxu0 0.0
    %125 = vmatpush1.msra.mxu0 0.0
    %126 = vmatprep.subr.mxu0 0.0
    %127 = vmatpush1.msra.mxu0 0.0
    %128 = vmatprep.subr.mxu0 0.0
    %129 = vmatpush1.msra.mxu0 0.0
    %130 = vmatprep.subr.mxu0 0.0
    %131 = vmatpush1.msra.mxu0 0.0
    %132 = vmatprep.subr.mxu0 0.0
    %133 = vmatpush1.msra.mxu0 0.0
    %134 = vmatprep.subr.mxu0 0.0
    %135 = vmatpush1.msra.mxu0 0.0
    %136 = vmatprep.subr.mxu0 0.0
    %137 = vmatpush1.msra.mxu0 0.0
    %138 = vmatprep.subr.mxu0 0.0
    %139 = vmatpush1.msra.mxu0 0.0
    %140 = vmatprep.subr.mxu0 0.0
    %141 = vmatpush1.msra.mxu0 0.0
    %142 = vmatprep.subr.mxu0 0.0
    %143 = vmatpush1.msra.mxu0 0.0
    %144 = vmatprep.subr.mxu0 0.0
    %145 = vmatpush1.msra.mxu0 0.0
    %146 = vmatprep.subr.mxu0 0.0
    %147 = vmatpush1.msra.mxu0 0.0
    %148 = vmatprep.subr.mxu0 0.0
    %149 = vmatpush1.msra.mxu0 0.0
    %150 = vmatprep.subr.mxu0 0.0
    %151 = vmatpush1.msra.mxu0 0.0
    %152 = vmatprep.subr.mxu0 0.0
    %153 = vmatpush1.msra.mxu0 0.0
    %154 = vmatprep.subr.mxu0 0.0
    %155 = vmatpush1.msra.mxu0 0.0
    %156 = vmatprep.subr.mxu0 0.0
    %157 = vmatpush1.msra.mxu0 0.0
    %158 = vmatprep.mubr.f32.mxu0 0.0
    %159 = vmatmul.mubr.f32.gmra.mrb[0].mxu0 %v92
    %v160 = vpop.f32.mrb[0].mxu0
    %v161 = vadd.f32 %v88, %v160
    %v162 = vpop.f32.mrb[0].mxu0
    %163 = vdwg.mxu0
    %v164 = vld [vmem:[#allocation5] sm:$0xff]
    %v165 = vld [vmem:[#allocation8] sm:$0xff]
    %v166 = vld [vmem:[#allocation8 + $0x8] sm:$0xff]
    %v167 = vld [vmem:[#allocation8 + $0x10] sm:$0xff]
    %v168 = vld [vmem:[#allocation8 + $0x18] sm:$0xff]
    %v169 = vld [vmem:[%s5] sm:$0x1]
    %v171 = vlaneseq
    %v172 = vshrl.u32 %v171, 7
    %v173 = vsub.s32 0, %v172
    %v174 = vrot.slane %v169, %v173
    %v177 = vsel %vm90, %v164, 0
    %179 = vmatprep.subr.mxu0 0.0
    %180 = vmatpush1.msra.mxu0 %v165
    %181 = vmatprep.subr.mxu0 0.0
    %182 = vmatpush1.msra.mxu0 %v166
    %183 = vmatprep.subr.mxu0 0.0
    %184 = vmatpush1.msra.mxu0 %v167
    %185 = vmatprep.subr.mxu0 0.0
    %186 = vmatpush1.msra.mxu0 %v168
    %187 = vmatprep.subr.mxu0 0.0
    %188 = vmatpush1.msra.mxu0 0.0
    %189 = vmatprep.subr.mxu0 0.0
    %190 = vmatpush1.msra.mxu0 0.0
    %191 = vmatprep.subr.mxu0 0.0
    %192 = vmatpush1.msra.mxu0 0.0
    %193 = vmatprep.subr.mxu0 0.0
    %194 = vmatpush1.msra.mxu0 0.0
    %195 = vmatprep.subr.mxu0 0.0
    %196 = vmatpush1.msra.mxu0 0.0
    %197 = vmatprep.subr.mxu0 0.0
    %198 = vmatpush1.msra.mxu0 0.0
    %199 = vmatprep.subr.mxu0 0.0
    %200 = vmatpush1.msra.mxu0 0.0
    %201 = vmatprep.subr.mxu0 0.0
    %202 = vmatpush1.msra.mxu0 0.0
    %203 = vmatprep.subr.mxu0 0.0
    %204 = vmatpush1.msra.mxu0 0.0
    %205 = vmatprep.subr.mxu0 0.0
    %206 = vmatpush1.msra.mxu0 0.0
    %207 = vmatprep.subr.mxu0 0.0
    %208 = vmatpush1.msra.mxu0 0.0
    %209 = vmatprep.subr.mxu0 0.0
    %210 = vmatpush1.msra.mxu0 0.0
    %211 = vmatprep.subr.mxu0 0.0
    %212 = vmatpush1.msra.mxu0 0.0
    %213 = vmatprep.subr.mxu0 0.0
    %214 = vmatpush1.msra.mxu0 0.0
    %215 = vmatprep.subr.mxu0 0.0
    %216 = vmatpush1.msra.mxu0 0.0
    %217 = vmatprep.subr.mxu0 0.0
    %218 = vmatpush1.msra.mxu0 0.0
    %219 = vmatprep.subr.mxu0 0.0
    %220 = vmatpush1.msra.mxu0 0.0
    %221 = vmatprep.subr.mxu0 0.0
    %222 = vmatpush1.msra.mxu0 0.0
    %223 = vmatprep.subr.mxu0 0.0
    %224 = vmatpush1.msra.mxu0 0.0
    %225 = vmatprep.subr.mxu0 0.0
    %226 = vmatpush1.msra.mxu0 0.0
    %227 = vmatprep.subr.mxu0 0.0
    %228 = vmatpush1.msra.mxu0 0.0
    %229 = vmatprep.subr.mxu0 0.0
    %230 = vmatpush1.msra.mxu0 0.0
    %231 = vmatprep.subr.mxu0 0.0
    %232 = vmatpush1.msra.mxu0 0.0
    %233 = vmatprep.subr.mxu0 0.0
    %234 = vmatpush1.msra.mxu0 0.0
    %235 = vmatprep.subr.mxu0 0.0
    %236 = vmatpush1.msra.mxu0 0.0
    %237 = vmatprep.subr.mxu0 0.0
    %238 = vmatpush1.msra.mxu0 0.0
    %239 = vmatprep.subr.mxu0 0.0
    %240 = vmatpush1.msra.mxu0 0.0
    %241 = vmatprep.subr.mxu0 0.0
    %242 = vmatpush1.msra.mxu0 0.0
    %243 = vmatprep.mubr.f32.mxu0 0.0
    %244 = vmatmul.mubr.f32.gmra.mrb[0].mxu0 %v177
    %v245 = vpop.f32.mrb[0].mxu0
    %v246 = vadd.f32 %v174, %v245
    %v247 = vpop.f32.mrb[0].mxu0
    %248 = vdwg.mxu0
    %249 = vst.msk [vmem:[#allocation10] sm:$0xff] %vm90, %v161
    %250 = vst.msk [vmem:[#allocation11] sm:$0xff] %vm90, %v246
    // Predicated region
    $region42: #{tpu_custom_call.1} parent=1 // pred_check
      _
    $region43: #{tpu_custom_call.1} parent=1 // pred_check_branch
      %252 = sbr.rel (0) target = $region45
    $region44: #{tpu_custom_call.1} parent=1 // pred_region
      %s254 = ssub.s32 128, 128
      %255 = vsyncadd [#allocation4], %s254
      %s257 = sshll.u32 [#allocation10], 4
      %s258 = int_to_ptr.vmem [resolvable:$true] %s257
      %260 = dma.vmem_to_hbm [thread:$0]  %s258, 128, %s6, [#allocation4]
    $region45: #{tpu_custom_call.1} parent=1 // pred_fallthru
      _
    // Predicated region
    $region46: #{tpu_custom_call.1} parent=1 // pred_check
      _
    $region47: #{tpu_custom_call.1} parent=1 // pred_check_branch
      %262 = sbr.rel (0) target = $region49
    $region48: #{tpu_custom_call.1} parent=1 // pred_region
      %s264 = ssub.s32 128, 128
      %265 = vsyncadd [#allocation12], %s264
      %s267 = sshll.u32 [#allocation11], 4
      %s268 = int_to_ptr.vmem [resolvable:$true] %s267
      %270 = dma.vmem_to_hbm [thread:$0]  %s268, 128, %s7, [#allocation12]
    $region49: #{tpu_custom_call.1} parent=1 // pred_fallthru
      _
    // Predicated region
    $region50: #{tpu_custom_call.1} parent=1 // pred_check
      _
    $region51: #{tpu_custom_call.1} parent=1 // pred_check_branch
      %272 = sbr.rel (0) target = $region53
    $region52: #{tpu_custom_call.1} parent=1 // pred_region
      %273 = dma.done [#allocation4], 128
    $region53: #{tpu_custom_call.1} parent=1 // pred_fallthru
      _
    // Predicated region
    $region54: #{tpu_custom_call.1} parent=1 // pred_check
      _
    $region55: #{tpu_custom_call.1} parent=1 // pred_check_branch
      %275 = sbr.rel (0) target = $region57
    $region56: #{tpu_custom_call.1} parent=1 // pred_region
      %276 = dma.done [#allocation12], 128
    $region57: #{tpu_custom_call.1} parent=1 // pred_fallthru
      _
    %277 = vsyncpa [#allocation3], 1
    %278 = vsyncpa [#allocation6], 1
    %279 = vsyncpa [#allocation9], 1
    %280 = vsyncpa [#allocation4], 1
    %281 = vsyncpa [#allocation12], 1

</llo_original>
